<compile_context>
chip_gen: v6e
topology: v6e:2x2x1
jax: 0.10.0
libtpu: 0.0.40
codegen_flags: <defaults>
</compile_context>

<pallas_src>
import functools

import jax
import jax.numpy as jnp
from jax.experimental import pallas as pl
from jax.experimental.pallas import tpu as pltpu


def _round_up(x, m):
    return ((x + m - 1) // m) * m


def _pick_tm(M, C):
    """Flattened-pixel tile size: a lane multiple, as large as possible
    (kernel is HBM-bound; big tiles amortize the ~0.35 us/step overhead),
    capped so the double-buffered bf16 input tile stays well under the v7x
    32 MiB scoped-VMEM default, and small enough that the grid has >=2 steps
    (both v7x TensorCores / megacore get work) when there is enough work."""
    lane = 128
    vmem_budget = 8 * 1024 * 1024                    # input double-buffer budget
    tm = (vmem_budget // (2 * 2 * max(C, 1))) // lane * lane
    tm = max(lane, min(8192, tm))
    if M > lane:
        tm = min(tm, _round_up(pl.cdiv(M, 2), lane))
    return max(lane, tm)


# ----------------------------------------------------------------------------
# Fused Pallas kernel: (1x1 conv + ReLU) -> (1x1 conv + sigmoid)
# Transposed layout: pixels on lanes, channels on sublanes.
# ----------------------------------------------------------------------------
def _fused_mask_head_kernel(xt_ref, w1t_ref, b1_ref, w2_ref, b2_ref, o_ref):
    # xt_ref : [C,  tm] bf16   (pixels on lanes)
    # w1t_ref: [Hd, C ] bf16   (resident weights)
    # b1_ref : [Hd, 1 ] f32
    # w2_ref : [Hd, 1 ] f32    (second conv as a column vector)
    # b2_ref : [1,  1 ] f32
    # o_ref  : [1,  tm] bf16   (lane-dense store)
    h = jnp.dot(w1t_ref[...], xt_ref[...], preferred_element_type=jnp.float32)
    h = jnp.maximum(h + b1_ref[...], 0.0)                          # [Hd, tm] f32
    # Hd -> 1 channel: VPU broadcast-mul + sublane reduce (XLU) instead of a
    # 1-output-row MXU pass; stays in f32 (no bf16 cast of the hidden act).
    m = jnp.sum(h * w2_ref[...], axis=0, keepdims=True) + b2_ref[...]  # [1, tm]
    # Exact sigmoid for the final activation (approx recip can exceed 1.0).
    m = 1.0 / (1.0 + jnp.exp(-m))
    o_ref[...] = m.astype(o_ref.dtype)


def fused_mask_head_pallas(xt_bf16, w1, b1, w2, b2):
    """xt_bf16: [C, M] bf16 (channels x flattened ROI pixels), w1: [C, Hd],
    b1: [Hd], w2: [Hd, 1], b2: [1] -> sigmoid mask values, shape [M], bf16."""
    C, M = xt_bf16.shape
    Hd = w1.shape[1]

    tm = _pick_tm(M, C)
    M_pad = _round_up(M, tm)
    if M_pad != M:
        xt_bf16 = jnp.pad(xt_bf16, ((0, 0), (0, M_pad - M)))
    grid = (M_pad // tm,)

    w1t = jnp.transpose(w1).astype(jnp.bfloat16)        # [Hd, C]
    b1c = b1.reshape(Hd, 1).astype(jnp.float32)
    w2c = w2.reshape(Hd, 1).astype(jnp.float32)
    b2c = b2.reshape(1, 1).astype(jnp.float32)

    cost = pl.CostEstimate(
        flops=2 * C * Hd * M_pad + 3 * Hd * M_pad + 4 * M_pad,
        transcendentals=M_pad,
        bytes_accessed=(C * M_pad * 2 + M_pad * 2          # xt in, mask out (bf16)
                        + Hd * C * 2 + Hd * 4 + Hd * 4 + 4),  # weights / biases
    )

    out = pl.pallas_call(
        _fused_mask_head_kernel,
        out_shape=jax.ShapeDtypeStruct((1, M_pad), jnp.bfloat16),
        grid=grid,
        in_specs=[
            pl.BlockSpec((C, tm), lambda i: (0, i)),     # X^T tile
            pl.BlockSpec((Hd, C), lambda i: (0, 0)),     # W1^T (resident)
            pl.BlockSpec((Hd, 1), lambda i: (0, 0)),     # b1
            pl.BlockSpec((Hd, 1), lambda i: (0, 0)),     # w2 column
            pl.BlockSpec((1, 1), lambda i: (0, 0)),      # b2
        ],
        out_specs=pl.BlockSpec((1, tm), lambda i: (0, i)),
        compiler_params=pltpu.CompilerParams(
            dimension_semantics=("parallel",)),
        cost_estimate=cost,
    )(xt_bf16, w1t, b1c, w2c, b2c)
    return out[0, :M]


# ----------------------------------------------------------------------------
# ROI bilinear crop as two dense interpolation matmuls (gather-free),
# emitting the channels-major bf16 slab the fused kernel consumes.
# TODO(synk): this is align-corners-style scaling with half-pixel bin centers,
#             a surrogate for torchvision RoIAlign (spec forward body is `pass`).
# ----------------------------------------------------------------------------
def roi_bilinear_crop_cm(features, rois, img_info, out_size):
    """features: NCHW [N,C,H,W]; rois: [R,5] = (batch_idx, x1,y1,x2,y2) in
    image coords; img_info: [N,3] = (img_h, img_w, scale).
    Returns a bf16 slab [C, R*S*S] (channels x flattened ROI pixels)."""
    N, C, H, W = features.shape
    R = rois.shape[0]
    S = out_size
    f32 = jnp.float32

    b = rois[:, 0].astype(jnp.int32)                              # [R]
    img_h = img_info[b, 0]
    img_w = img_info[b, 1]
    sy = (H - 1.0) / jnp.maximum(img_h - 1.0, 1.0)
    sx = (W - 1.0) / jnp.maximum(img_w - 1.0, 1.0)
    x1 = rois[:, 1] * sx
    y1 = rois[:, 2] * sy
    x2 = rois[:, 3] * sx
    y2 = rois[:, 4] * sy

    bins = (jnp.arange(S, dtype=f32) + 0.5) / S                   # [S]
    ys = jnp.clip(y1[:, None] + bins[None, :] * (y2 - y1)[:, None], 0.0, H - 1.0)
    xs = jnp.clip(x1[:, None] + bins[None, :] * (x2 - x1)[:, None], 0.0, W - 1.0)

    y0 = jnp.floor(ys).astype(jnp.int32)
    x0 = jnp.floor(xs).astype(jnp.int32)
    y1i = jnp.minimum(y0 + 1, H - 1)
    x1i = jnp.minimum(x0 + 1, W - 1)
    wy = ys - y0.astype(f32)                                      # [R,S]
    wx = xs - x0.astype(f32)                                      # [R,S]

    # Row-interpolation matrix with the batch selection folded in:
    # AY[r, s, b*H + y] carries the bilinear row weights (2 nonzeros per row).
    rows = jnp.arange(N * H)
    y0g = b[:, None] * H + y0                                     # [R,S]
    y1g = b[:, None] * H + y1i
    AY = ((rows[None, None, :] == y0g[..., None]).astype(f32) * (1.0 - wy)[..., None]
          + (rows[None, None, :] == y1g[..., None]).astype(f32) * wy[..., None])  # [R,S,N*H]

    cols = jnp.arange(W)
    AX = ((cols[None, None, :] == x0[..., None]).astype(f32) * (1.0 - wx)[..., None]
          + (cols[None, None, :] == x1i[..., None]).astype(f32) * wx[..., None])  # [R,S,W]

    # NCHW -> [C, N*H, W] so every ROI contracts against one dense operand.
    fm = jnp.transpose(features, (1, 0, 2, 3)).reshape(C, N * H, W).astype(f32)
    t = jnp.einsum('rsk,ckw->rcsw', AY, fm)                       # rows interpolated
    pooled = jnp.einsum('rcsw,rxw->crsx', t, AX)                  # cols; channels-major
    return pooled.reshape(C, R * S * S).astype(jnp.bfloat16)      # [C, M]


# ----------------------------------------------------------------------------
# MaskHead forward
# ----------------------------------------------------------------------------
@functools.partial(jax.jit, static_argnums=(3, 4))
def mask_head_forward(features, rois, img_info, mask_in_size, mask_out_size, params):
    """features: NCHW [N,C,H,W]; rois: [R,5]; img_info: [N,3].
    Returns mask probs [R, 1, mask_out_size, mask_out_size] (float32)."""
    R = rois.shape[0]
    S = mask_in_size

    # ROI crop -> channels-major bf16 slab, consumed directly by the kernel.
    xt = roi_bilinear_crop_cm(features, rois, img_info, S)        # [C, R*S*S]

    # Fused (1x1 conv + ReLU) -> (1x1 conv + sigmoid) at S resolution.
    mask_flat = fused_mask_head_pallas(
        xt, params["w1"], params["b1"], params["w2"], params["b2"])  # [M] bf16
    m = mask_flat.reshape(R, S, S)

    # Upsample the 1-channel mask to mask_out_size.  Both convs are 1x1
    # (pointwise), so conv∘upsample == upsample∘conv for NN upsampling; only
    # the 1-channel mask is ever upsampled.
    # TODO(synk): a real Mask R-CNN head uses 3x3 convs + ConvTranspose2d; the
    #             reference forward body is `pass`, so NN-repeat is the
    #             surrogate semantics here.
    f = mask_out_size // mask_in_size
    m = jnp.repeat(jnp.repeat(m, f, axis=1), f, axis=2)           # [R, So, So]
    return m[:, None, :, :].astype(jnp.float32)                   # [R, 1, So, So]


def init_params(key, in_channels, hidden):
    k1, k2 = jax.random.split(key)
    return {
        "w1": 0.1 * jax.random.normal(k1, (in_channels, hidden), jnp.float32),
        "b1": jnp.zeros((hidden,), jnp.float32),
        "w2": 0.1 * jax.random.normal(k2, (hidden, 1), jnp.float32),
        "b2": jnp.zeros((1,), jnp.float32),
    }


if __name__ == "__main__":
    key = jax.random.PRNGKey(0)
    k_feat, k_param = jax.random.split(key, 2)

    N, C, H, W = 2, 4, 16, 16
    R = 4
    mask_in_size, mask_out_size = 8, 16
    hidden = 32

    features = jax.random.normal(k_feat, (N, C, H, W), jnp.float32)
    # rois: (batch_idx, x1, y1, x2, y2) in 32x32 image coords
    rois = jnp.array(
        [
            [0.0, 2.0, 2.0, 20.0, 20.0],
            [0.0, 8.0, 4.0, 28.0, 30.0],
            [1.0, 0.0, 0.0, 31.0, 31.0],
            [1.0, 10.0, 12.0, 26.0, 24.0],
        ],
        dtype=jnp.float32,
    )
    img_info = jnp.array([[32.0, 32.0, 1.0], [32.0, 32.0, 1.0]], dtype=jnp.float32)

    params = init_params(k_param, C, hidden)

    out = mask_head_forward(features, rois, img_info, mask_in_size, mask_out_size, params)
    out = jax.block_until_ready(out)
    assert out.shape == (R, 1, mask_out_size, mask_out_size)
    assert bool(jnp.all(jnp.isfinite(out)))
    assert bool(jnp.all((out >= 0.0) & (out <= 1.0)))
    print("KERNEL_OK")
</pallas_src>

<mosaic_0001>
module attributes {stable_mosaic.version = 11 : i64} {
  func.func @_fused_mask_head_kernel(%arg0: i32, %arg1: memref<4x128xbf16, #tpu.memory_space<vmem>>, %arg2: memref<32x4xbf16, #tpu.memory_space<vmem>>, %arg3: memref<32x1xf32, #tpu.memory_space<vmem>>, %arg4: memref<32x1xf32, #tpu.memory_space<vmem>>, %arg5: memref<1x1xf32, #tpu.memory_space<vmem>>, %arg6: memref<1x128xbf16, #tpu.memory_space<vmem>>) attributes {dimension_semantics = [#tpu.dimension_semantics<parallel>], iteration_bounds = array<i64: 2>, scalar_prefetch = 0 : i64, scratch_operands = 0 : i64, tpu.core_type = #tpu.core_type<tc>, window_params = [{transform_indices = @transform_0, window_bounds = array<i64: 4, 128>}, {pipeline_mode = #tpu.pipeline_mode<synchronous>, transform_indices = @transform_1, window_bounds = array<i64: 32, 4>}, {pipeline_mode = #tpu.pipeline_mode<synchronous>, transform_indices = @transform_2, window_bounds = array<i64: 32, 1>}, {pipeline_mode = #tpu.pipeline_mode<synchronous>, transform_indices = @transform_3, window_bounds = array<i64: 32, 1>}, {pipeline_mode = #tpu.pipeline_mode<synchronous>, transform_indices = @transform_4, window_bounds = array<i64: 1, 1>}, {transform_indices = @transform_5, window_bounds = array<i64: 1, 128>}]} {
    %c0 = arith.constant 0 : index
    %c0_0 = arith.constant 0 : index
    %0 = vector.load %arg2[%c0, %c0_0] : memref<32x4xbf16, #tpu.memory_space<vmem>>, vector<32x4xbf16>
    %c0_1 = arith.constant 0 : index
    %c0_2 = arith.constant 0 : index
    %1 = vector.load %arg1[%c0_1, %c0_2] : memref<4x128xbf16, #tpu.memory_space<vmem>>, vector<4x128xbf16>
    %cst = arith.constant dense<0.000000e+00> : vector<32x128xf32>
    %2 = tpu.matmul %0, %1, %cst {dimension_numbers = #tpu.dot_dimension_numbers<[1], [0], [0], [1], [0, 0, 1, 1], [], []>} : vector<32x4xbf16>, vector<4x128xbf16>, vector<32x128xf32> -> vector<32x128xf32>
    %c0_3 = arith.constant 0 : index
    %c0_4 = arith.constant 0 : index
    %3 = vector.load %arg3[%c0_3, %c0_4] : memref<32x1xf32, #tpu.memory_space<vmem>>, vector<32x1xf32>
    %4 = vector.broadcast %3 : vector<32x1xf32> to vector<32x128xf32>
    %5 = arith.addf %2, %4 : vector<32x128xf32>
    %cst_5 = arith.constant 0.000000e+00 : f32
    %6 = vector.broadcast %cst_5 : f32 to vector<32x128xf32>
    %7 = arith.maximumf %5, %6 : vector<32x128xf32>
    %c0_6 = arith.constant 0 : index
    %c0_7 = arith.constant 0 : index
    %8 = vector.load %arg4[%c0_6, %c0_7] : memref<32x1xf32, #tpu.memory_space<vmem>>, vector<32x1xf32>
    %9 = vector.broadcast %8 : vector<32x1xf32> to vector<32x128xf32>
    %10 = arith.mulf %7, %9 : vector<32x128xf32>
    %cst_8 = arith.constant dense<0.000000e+00> : vector<128xf32>
    %11 = vector.multi_reduction <add>, %10, %cst_8 [0] : vector<32x128xf32> to vector<128xf32>
    %12 = vector.shape_cast %11 : vector<128xf32> to vector<1x128xf32>
    %c0_9 = arith.constant 0 : index
    %c0_10 = arith.constant 0 : index
    %13 = vector.load %arg5[%c0_9, %c0_10] : memref<1x1xf32, #tpu.memory_space<vmem>>, vector<1x1xf32>
    %14 = vector.broadcast %13 : vector<1x1xf32> to vector<1x128xf32>
    %15 = arith.addf %12, %14 : vector<1x128xf32>
    %cst_11 = arith.constant 0.000000e+00 : f32
    %16 = vector.broadcast %cst_11 : f32 to vector<1x128xf32>
    %17 = arith.subf %16, %15 : vector<1x128xf32>
    %18 = math.exp %17 : vector<1x128xf32>
    %cst_12 = arith.constant 1.000000e+00 : f32
    %19 = vector.broadcast %cst_12 : f32 to vector<1x128xf32>
    %20 = arith.addf %19, %18 : vector<1x128xf32>
    %cst_13 = arith.constant 1.000000e+00 : f32
    %21 = vector.broadcast %cst_13 : f32 to vector<1x128xf32>
    %22 = arith.divf %21, %20 : vector<1x128xf32>
    %23 = arith.truncf %22 : vector<1x128xf32> to vector<1x128xbf16>
    %c0_14 = arith.constant 0 : index
    %c0_15 = arith.constant 0 : index
    %24 = vector.load %arg6[%c0_14, %c0_15] : memref<1x128xbf16, #tpu.memory_space<vmem>>, vector<1x128xbf16>
    tpu.vector_store %arg6[%c0_14, %c0_15], %23 {strides = array<i32>} : memref<1x128xbf16, #tpu.memory_space<vmem>>, vector<1x128xbf16>,
    return
  }
  func.func @transform_0(%arg0: i32) -> (i32, i32) {
    %c0_i32 = arith.constant 0 : i32
    %c0_i32_0 = arith.constant 0 : i32
    return %c0_i32, %arg0 : i32, i32
  }
  func.func @transform_1(%arg0: i32) -> (i32, i32) {
    %c0_i32 = arith.constant 0 : i32
    %c0_i32_0 = arith.constant 0 : i32
    %c0_i32_1 = arith.constant 0 : i32
    return %c0_i32, %c0_i32_0 : i32, i32
  }
  func.func @transform_2(%arg0: i32) -> (i32, i32) {
    %c0_i32 = arith.constant 0 : i32
    %c0_i32_0 = arith.constant 0 : i32
    %c0_i32_1 = arith.constant 0 : i32
    return %c0_i32, %c0_i32_0 : i32, i32
  }
  func.func @transform_3(%arg0: i32) -> (i32, i32) {
    %c0_i32 = arith.constant 0 : i32
    %c0_i32_0 = arith.constant 0 : i32
    %c0_i32_1 = arith.constant 0 : i32
    return %c0_i32, %c0_i32_0 : i32, i32
  }
  func.func @transform_4(%arg0: i32) -> (i32, i32) {
    %c0_i32 = arith.constant 0 : i32
    %c0_i32_0 = arith.constant 0 : i32
    %c0_i32_1 = arith.constant 0 : i32
    return %c0_i32, %c0_i32_0 : i32, i32
  }
  func.func @transform_5(%arg0: i32) -> (i32, i32) {
    %c0_i32 = arith.constant 0 : i32
    %c0_i32_0 = arith.constant 0 : i32
    return %c0_i32, %arg0 : i32, i32
  }
}

</mosaic_0001>

<llo_original>
// kernel: mask_head_forward.1
$region0: #{mask_head_forward.1}
  #allocation0 [shape = 'u32[]', space=smem, size = 0x4, offset = 0x4, fixed_abs, tag = 'smem constant byte address 0x4 - core index']
  #allocation1 [shape = 'u32[144,128]{1,0:T(1,128)}', space=vmem, size = 0x12000, scoped, tag = 'internal scratch']
  #allocation2 [shape = 'f32[1,1]{1,0:T(1,128)S(1)}', space=vmem, size = 0x200, scoped, tag = 'scoped memory for mask_head_forward.1']
  %s0 = inlined_call_operand.vmem [shape: bf16[4,256], index: 0, kind: input, shape index: {}]
  %s1 = inlined_call_operand.vmem [shape: bf16[32,4], index: 1, kind: input, shape index: {}]
  %s2 = inlined_call_operand.vmem [shape: f32[32,1], index: 2, kind: input, shape index: {}]
  %s3 = inlined_call_operand.vmem [shape: f32[32,1], index: 3, kind: input, shape index: {}]
  %s4 = inlined_call_operand.<no memory space> [shape: f32[1,1], index: 4, kind: input, shape index: {}]
  %s5 = inlined_call_operand.vmem [shape: bf16[1,256], index: 5, kind: output, shape index: {}]
  %s6 = sld [smem:[#allocation0]]
  $region53: #{mask_head_forward.1} parent=0
    _
  %s8 = ssub.s32 1, %s6
  %s9 = scalar_select 0, %s8, %s6
  %v10 = vstv %s4
  %11 = vst [vmem:[#allocation2] sm:$0x1] %v10
  loop: start=0, step=1, limit=4
  $region2: #{mask_head_forward.1} parent=0 // loop_pre_header
    _
  $region3: #{mask_head_forward.1} parent=0 // loop_header
    %s13 = sphi 0, %s17
    %p14 = scmp.ge.s32.totalorder %s13, 4
    %s23 = sphi 0, %s25
    %s26 = sphi 0, %s23
    %s27 = sphi 0, %s26
    %s43 = sphi 0, %s27
    %s47 = sphi 0, %s47
    %s49 = sphi 0, %s47
    %s50 = sphi 0, %s49
    %s64 = sphi 0, %s50
    %s68 = sphi 0, %s68
    %s70 = sphi 0, %s68
    %s71 = sphi 0, %s70
    %s85 = sphi 0, %s71
    %s89 = sphi 0, %s89
    %s91 = sphi 0, %s89
    %s92 = sphi 0, %s91
    %s106 = sphi 0, %s92
    %s110 = sphi 0, %s110
    %s112 = sphi 0, %s110
    %s113 = sphi 0, %s112
    %s127 = sphi 0, %s113
    %s133 = sphi 0, %s135
    %s136 = sphi 0, %s133
    %s137 = sphi 0, %s136
    %s153 = sphi 0, %s137
  $region4: #{mask_head_forward.1} parent=0 // loop_header_branch
    %16 = sbr.rel (%p14) target = $region8
  $region5: #{mask_head_forward.1} parent=0 // loop_body
    %s18 = ssub.s32 %s13, 1
    %s19 = ssub.s32 %s13, 2
    %s20 = sadd.s32 %s13, 1
    %s21 = ssub.s32 %s13, %s20
    %p22 = scmp.eq.s32.totalorder %s21, 0
    %s24 = sadd.s32 %s23, 1
    %s25 = scalar_select %p22, %s23, %s24
    %p28 = pneg %p22
    %p29 = scmp.eq.s32.totalorder %s13, 1
    %p30 = por %p28, %p29
    %p31 = scmp.ne.s32.totalorder %s23, %s26
    %p32 = scmp.eq.s32.totalorder %s13, 0
    %p33 = por %p31, %p32
    %p34 = scmp.ne.s32.totalorder %s23, %s26
    %p35 = scmp.eq.s32.totalorder %s18, 1
    %p36 = por %p34, %p35
    %p37 = scmp.ne.s32.totalorder %s26, %s27
    %p38 = scmp.eq.s32.totalorder %s18, 0
    %p39 = por %p37, %p38
    %p40 = scmp.ne.s32.totalorder %s26, %s27
    %p41 = scmp.eq.s32.totalorder %s19, 1
    %p42 = por %p40, %p41
    %p44 = scmp.ne.s32.totalorder %s27, %s43
    %p45 = scmp.eq.s32.totalorder %s19, 0
    %p46 = por %p44, %p45
    %s48 = sadd.s32 %s47, 1
    %p51 = scmp.eq.s32.totalorder %s13, 1
    %p52 = scmp.ne.s32.totalorder %s47, %s49
    %p53 = scmp.eq.s32.totalorder %s13, 0
    %p54 = por %p52, %p53
    %p55 = scmp.ne.s32.totalorder %s47, %s49
    %p56 = scmp.eq.s32.totalorder %s18, 1
    %p57 = por %p55, %p56
    %p58 = scmp.ne.s32.totalorder %s49, %s50
    %p59 = scmp.eq.s32.totalorder %s18, 0
    %p60 = por %p58, %p59
    %p61 = scmp.ne.s32.totalorder %s49, %s50
    %p62 = scmp.eq.s32.totalorder %s19, 1
    %p63 = por %p61, %p62
    %p65 = scmp.ne.s32.totalorder %s50, %s64
    %p66 = scmp.eq.s32.totalorder %s19, 0
    %p67 = por %p65, %p66
    %s69 = sadd.s32 %s68, 1
    %p72 = scmp.eq.s32.totalorder %s13, 1
    %p73 = scmp.ne.s32.totalorder %s68, %s70
    %p74 = scmp.eq.s32.totalorder %s13, 0
    %p75 = por %p73, %p74
    %p76 = scmp.ne.s32.totalorder %s68, %s70
    %p77 = scmp.eq.s32.totalorder %s18, 1
    %p78 = por %p76, %p77
    %p79 = scmp.ne.s32.totalorder %s70, %s71
    %p80 = scmp.eq.s32.totalorder %s18, 0
    %p81 = por %p79, %p80
    %p82 = scmp.ne.s32.totalorder %s70, %s71
    %p83 = scmp.eq.s32.totalorder %s19, 1
    %p84 = por %p82, %p83
    %p86 = scmp.ne.s32.totalorder %s71, %s85
    %p87 = scmp.eq.s32.totalorder %s19, 0
    %p88 = por %p86, %p87
    %s90 = sadd.s32 %s89, 1
    %p93 = scmp.eq.s32.totalorder %s13, 1
    %p94 = scmp.ne.s32.totalorder %s89, %s91
    %p95 = scmp.eq.s32.totalorder %s13, 0
    %p96 = por %p94, %p95
    %p97 = scmp.ne.s32.totalorder %s89, %s91
    %p98 = scmp.eq.s32.totalorder %s18, 1
    %p99 = por %p97, %p98
    %p100 = scmp.ne.s32.totalorder %s91, %s92
    %p101 = scmp.eq.s32.totalorder %s18, 0
    %p102 = por %p100, %p101
    %p103 = scmp.ne.s32.totalorder %s91, %s92
    %p104 = scmp.eq.s32.totalorder %s19, 1
    %p105 = por %p103, %p104
    %p107 = scmp.ne.s32.totalorder %s92, %s106
    %p108 = scmp.eq.s32.totalorder %s19, 0
    %p109 = por %p107, %p108
    %s111 = sadd.s32 %s110, 1
    %p114 = scmp.eq.s32.totalorder %s13, 1
    %p115 = scmp.ne.s32.totalorder %s110, %s112
    %p116 = scmp.eq.s32.totalorder %s13, 0
    %p117 = por %p115, %p116
    %p118 = scmp.ne.s32.totalorder %s110, %s112
    %p119 = scmp.eq.s32.totalorder %s18, 1
    %p120 = por %p118, %p119
    %p121 = scmp.ne.s32.totalorder %s112, %s113
    %p122 = scmp.eq.s32.totalorder %s18, 0
    %p123 = por %p121, %p122
    %p124 = scmp.ne.s32.totalorder %s112, %s113
    %p125 = scmp.eq.s32.totalorder %s19, 1
    %p126 = por %p124, %p125
    %p128 = scmp.ne.s32.totalorder %s113, %s127
    %p129 = scmp.eq.s32.totalorder %s19, 0
    %p130 = por %p128, %p129
    %s131 = ssub.s32 %s13, %s20
    %p132 = scmp.eq.s32.totalorder %s131, 0
    %s134 = sadd.s32 %s133, 1
    %s135 = scalar_select %p132, %s133, %s134
    %p138 = pneg %p132
    %p139 = scmp.eq.s32.totalorder %s13, 1
    %p140 = por %p138, %p139
    %p141 = scmp.ne.s32.totalorder %s133, %s136
    %p142 = scmp.eq.s32.totalorder %s13, 0
    %p143 = por %p141, %p142
    %p144 = scmp.ne.s32.totalorder %s133, %s136
    %p145 = scmp.eq.s32.totalorder %s18, 1
    %p146 = por %p144, %p145
    %p147 = scmp.ne.s32.totalorder %s136, %s137
    %p148 = scmp.eq.s32.totalorder %s18, 0
    %p149 = por %p147, %p148
    %p150 = scmp.ne.s32.totalorder %s136, %s137
    %p151 = scmp.eq.s32.totalorder %s19, 1
    %p152 = por %p150, %p151
    %p154 = scmp.ne.s32.totalorder %s137, %s153
    %p155 = scmp.eq.s32.totalorder %s19, 0
    %p156 = por %p154, %p155
    %p157 = scmp.le.s32.totalorder 1, %s13
    %p158 = scmp.lt.s32.totalorder %s13, 3
    %p159 = pnand %p157, %p158
    %p160 = pneg %p159
    // Predicated region
    $region9: #{mask_head_forward.1} parent=5 // pred_check
      _
    $region10: #{mask_head_forward.1} parent=5 // pred_check_branch
      %162 = sbr.rel (%p159) target = $region12
    $region11: #{mask_head_forward.1} parent=5 // pred_region
      %s163 = ssub.s32 %s13, 1
      // Predicated region
      $region13: #{mask_head_forward.1} parent=11 // pred_check
        %p164 = pneg %p60
      $region14: #{mask_head_forward.1} parent=11 // pred_check_branch
        %166 = sbr.rel (%p164) target = $region16
      $region15: #{mask_head_forward.1} parent=11 // pred_region
        _
      $region16: #{mask_head_forward.1} parent=11 // pred_fallthru
        _
      // Predicated region
      $region17: #{mask_head_forward.1} parent=11 // pred_check
        %p167 = pneg %p81
      $region18: #{mask_head_forward.1} parent=11 // pred_check_branch
        %169 = sbr.rel (%p167) target = $region20
      $region19: #{mask_head_forward.1} parent=11 // pred_region
        _
      $region20: #{mask_head_forward.1} parent=11 // pred_fallthru
        _
      // Predicated region
      $region21: #{mask_head_forward.1} parent=11 // pred_check
        %p170 = pneg %p102
      $region22: #{mask_head_forward.1} parent=11 // pred_check_branch
        %172 = sbr.rel (%p170) target = $region24
      $region23: #{mask_head_forward.1} parent=11 // pred_region
        _
      $region24: #{mask_head_forward.1} parent=11 // pred_fallthru
        _
      // Predicated region
      $region25: #{mask_head_forward.1} parent=11 // pred_check
        %p173 = pneg %p123
      $region26: #{mask_head_forward.1} parent=11 // pred_check_branch
        %175 = sbr.rel (%p173) target = $region28
      $region27: #{mask_head_forward.1} parent=11 // pred_region
        _
      $region28: #{mask_head_forward.1} parent=11 // pred_fallthru
        _
    $region12: #{mask_head_forward.1} parent=5 // pred_fallthru
      _
    %p176 = scmp.lt.s32.totalorder %s13, 2
    // Predicated region
    $region29: #{mask_head_forward.1} parent=5 // pred_check
      %p177 = pneg %p176
    $region30: #{mask_head_forward.1} parent=5 // pred_check_branch
      %179 = sbr.rel (%p177) target = $region32
    $region31: #{mask_head_forward.1} parent=5 // pred_region
      // Predicated region
      $region33: #{mask_head_forward.1} parent=31 // pred_check
        %p180 = pneg %p33
      $region34: #{mask_head_forward.1} parent=31 // pred_check_branch
        %182 = sbr.rel (%p180) target = $region36
      $region35: #{mask_head_forward.1} parent=31 // pred_region
        %p183 = scmp.lt.s32.totalorder %s13, 1
        %s184 = scalar_select %p183, %s13, 1
        %s185 = smul.addr %s184, 2
        %s186 = scalar_lea.vmem %s0, %s185
      $region36: #{mask_head_forward.1} parent=31 // pred_fallthru
        _
    $region32: #{mask_head_forward.1} parent=5 // pred_fallthru
      _
    %p187 = scmp.le.s32.totalorder 1, %s13
    %p188 = scmp.lt.s32.totalorder %s13, 3
    %p189 = pnand %p187, %p188
    %p190 = pneg %p189
    // Predicated region
    $region37: #{mask_head_forward.1} parent=5 // pred_check
      _
    $region38: #{mask_head_forward.1} parent=5 // pred_check_branch
      %192 = sbr.rel (%p189) target = $region40
    $region39: #{mask_head_forward.1} parent=5 // pred_region
      %s193 = ssub.s32 %s13, 1
      %p194 = scmp.lt.s32.totalorder %s18, 1
      %s195 = scalar_select %p194, %s18, 1
      %s196 = smul.addr %s195, 2
      %s197 = scalar_lea.vmem %s0, %s196
      %p198 = pneg %p39
      %p199 = pneg %p36
      %p200 = pneg %p60
      %p201 = pneg %p57
      %p202 = pneg %p81
      %p203 = pneg %p78
      %p204 = pneg %p102
      %p205 = pneg %p99
      %p206 = pneg %p123
      %p207 = pneg %p120
      %p208 = pneg %p149
      %p209 = pneg %p146
      %p210 = scmp.lt.s32.totalorder %s18, 1
      %s211 = scalar_select %p210, %s18, 1
      %s212 = scalar_lea.vmem %s5, %s211
      %p213 = scmp.lt.s32.totalorder %s18, 1
      %s214 = scalar_select %p213, %s18, 1
      %s215 = smul.addr %s214, 2
      %s216 = scalar_lea.vmem %s0, %s215
      %p217 = scmp.lt.s32.totalorder %s18, 1
      %s218 = scalar_select %p217, %s18, 1
      %s219 = scalar_lea.vmem %s5, %s218
      %v221 = vld [vmem:[%s1] sm:$0xf]
      %v222 = vld [vmem:[%s1 + $0x4] sm:$0xf]
      %v223 = vld [vmem:[%s1 + $0x8] sm:$0xf]
      %v224 = vld [vmem:[%s1 + $0xc] sm:$0xf]
      %v225 = vld [vmem:[%s216] sm:$0x3]
      %v226 = vld [vmem:[%s2] sm:$0xff]
      %v227 = vld [vmem:[%s2 + $0x8] sm:$0xff]
      %v228 = vld [vmem:[%s2 + $0x10] sm:$0xff]
      %v229 = vld [vmem:[%s2 + $0x18] sm:$0xff]
      %231 = vset.pattern.permute.xlu0 0
      %232 = vperm.xlu0 %231, %v226
      %v233 = vpop.permute.xlu0 %232
      %236 = vset.pattern.permute.xlu0 0
      %237 = vperm.xlu0 %236, %v227
      %v238 = vpop.permute.xlu0 %237
      %241 = vset.pattern.permute.xlu0 0
      %242 = vperm.xlu0 %241, %v228
      %v243 = vpop.permute.xlu0 %242
      %246 = vset.pattern.permute.xlu0 0
      %247 = vperm.xlu0 %246, %v229
      %v248 = vpop.permute.xlu0 %247
      %v254 = vunpack.c.l.b16 %v221
      %v255 = vunpack.c.l.b16 %v222
      %v256 = vunpack.c.l.b16 %v223
      %v257 = vunpack.c.l.b16 %v224
      %v258 = vpack.c.b16 %v255, %v254
      %v259 = vpack.c.b16 %v257, %v256
      %vm260 = vcmask 31744
      %v262 = vsel %vm260, %v258, 0
      %v265 = vsel %vm260, %v259, 0
      %vm267 = vcmask 1041408
      %v269 = vsel %vm267, %v225, 0
      %271 = vmatprep.subr.bf16.mxu0 0
      %272 = vmatpush1.bf16.msra.mxu0 0
      %273 = vmatprep.subr.bf16.mxu0 0
      %274 = vmatpush1.bf16.msra.mxu0 0
      %275 = vmatprep.subr.bf16.mxu0 0
      %276 = vmatpush1.bf16.msra.mxu0 0
      %277 = vmatprep.subr.bf16.mxu0 0
      %278 = vmatpush1.bf16.msra.mxu0 0
      %279 = vmatprep.subr.bf16.mxu0 0
      %280 = vmatpush1.bf16.msra.mxu0 0
      %281 = vmatprep.subr.bf16.mxu0 0
      %282 = vmatpush1.bf16.msra.mxu0 0
      %283 = vmatprep.subr.bf16.mxu0 0
      %284 = vmatpush1.bf16.msra.mxu0 0
      %285 = vmatprep.subr.bf16.mxu0 0
      %286 = vmatpush1.bf16.msra.mxu0 %v269
      %287 = vmatprep.subr.bf16.mxu0 0
      %288 = vmatpush2.bf16.msra.mxu0 0
      %289 = vmatprep.subr.bf16.mxu0 0
      %290 = vmatpush2.bf16.msra.mxu0 0
      %291 = vmatprep.subr.bf16.mxu0 0
      %292 = vmatpush2.bf16.msra.mxu0 0
      %293 = vmatprep.subr.bf16.mxu0 0
      %294 = vmatpush2.bf16.msra.mxu0 0
      %295 = vmatprep.subr.bf16.mxu0 0
      %296 = vmatpush2.bf16.msra.mxu0 0
      %297 = vmatprep.subr.bf16.mxu0 0
      %298 = vmatpush2.bf16.msra.mxu0 0
      %299 = vmatprep.subr.bf16.mxu0 0
      %300 = vmatpush2.bf16.msra.mxu0 0
      %301 = vmatprep.subr.bf16.mxu0 0
      %302 = vmatpush2.bf16.msra.mxu0 0
      %303 = vmatprep.mubr.bf16.mxu0 0
      %304 = vmatmul.mubr.bf16.gmra.mxu0 %v262
      %v305 = vpop.f32.mrf.mxu0
      %v306 = vadd.f32 %v233, %v305
      %v307 = vpop.f32.mrf.mxu0
      %v308 = vpop.f32.mrf.mxu0
      %v309 = vadd.f32 %v238, %v308
      %v310 = vpop.f32.mrf.mxu0
      %311 = vmatprep.mubr.bf16.mxu0 0
      %312 = vmatmul.mubr.bf16.gmra.mxu0 %v265
      %v313 = vpop.f32.mrf.mxu0
      %v314 = vadd.f32 %v243, %v313
      %v315 = vpop.f32.mrf.mxu0
      %v316 = vpop.f32.mrf.mxu0
      %v317 = vadd.f32 %v248, %v316
      %v318 = vpop.f32.mrf.mxu0
      %319 = vdwg.mxu0
      %v320 = vmax.f32 %v306, 0.0
      %v321 = vmax.f32 %v309, 0.0
      %v322 = vmax.f32 %v314, 0.0
      %v323 = vmax.f32 %v317, 0.0
      %v324 = vld [vmem:[%s3] sm:$0xff]
      %v325 = vld [vmem:[%s3 + $0x8] sm:$0xff]
      %v326 = vld [vmem:[%s3 + $0x10] sm:$0xff]
      %v327 = vld [vmem:[%s3 + $0x18] sm:$0xff]
      %329 = vset.pattern.permute.xlu0 0
      %330 = vperm.xlu0 %329, %v324
      %v331 = vpop.permute.xlu0 %330
      %334 = vset.pattern.permute.xlu0 0
      %335 = vperm.xlu0 %334, %v325
      %v336 = vpop.permute.xlu0 %335
      %339 = vset.pattern.permute.xlu0 0
      %340 = vperm.xlu0 %339, %v326
      %v341 = vpop.permute.xlu0 %340
      %344 = vset.pattern.permute.xlu0 0
      %345 = vperm.xlu0 %344, %v327
      %v346 = vpop.permute.xlu0 %345
      %v348 = vmul.f32 %v320, %v331
      %v349 = vmul.f32 %v321, %v336
      %v350 = vmul.f32 %v322, %v341
      %v351 = vmul.f32 %v323, %v346
      %v352 = vadd.f32 %v348, %v349
      %v353 = vadd.f32 %v352, %v350
      %v354 = vadd.f32 %v353, %v351
      %v355 = vrot.slane %v354, 4
      %v356 = vadd.f32 %v354, %v355
      %v357 = vrot.slane %v356, 2
      %v358 = vadd.f32 %v356, %v357
      %v359 = vrot.slane %v358, 1
      %v360 = vadd.f32 %v358, %v359
      %v361 = vld [vmem:[#allocation2] sm:$0x1]
      %363 = vset.pattern.permute.xlu0 0
      %364 = vperm.xlu0 %363, %v361
      %v365 = vpop.permute.xlu0 %364
      %v367 = vlaneseq
      %v368 = vshrl.u32 %v367, 7
      %v369 = vsub.s32 0, %v368
      %v370 = vrot.slane %v365, %v369
      %v371 = vadd.f32 %v360, %v370
      %v372 = vsub.f32 0.0, %v371
      %v373 = vmul.f32 %v372, 1.442695
      %v374 = vpow.pop %v373
      %v375 = vadd.f32 %v374, 1.0
      %v376 = vrcp.pop %v375
      %v377 = vmul.f32 1.0, %v376
      %v378 = vpack.c.bf16 %v377, %v377
      %vm379 = vcmask 1040384
      %vm380 = vsmask.f32 256
      %vm381 = vmand %vm379, %vm380
      %v382 = vld [vmem:[%s219] sm:$0x1]
      %v383 = vsel %vm381, %v378, %v382
      %384 = vst [vmem:[%s219] sm:$0x1] %v383
      %p385 = scmp.lt.s32.totalorder %s18, 1
      %s386 = scalar_select %p385, %s18, 1
      %s387 = scalar_lea.vmem %s5, %s386
      // Predicated region
      $region41: #{mask_head_forward.1} parent=39 // pred_check
        %p388 = pneg %p146
      $region42: #{mask_head_forward.1} parent=39 // pred_check_branch
        %390 = sbr.rel (%p388) target = $region44
      $region43: #{mask_head_forward.1} parent=39 // pred_region
        _
      $region44: #{mask_head_forward.1} parent=39 // pred_fallthru
        _
    $region40: #{mask_head_forward.1} parent=5 // pred_fallthru
      _
    %p391 = scmp.le.s32.totalorder 2, %s13
    // Predicated region
    $region45: #{mask_head_forward.1} parent=5 // pred_check
      %p392 = pneg %p391
    $region46: #{mask_head_forward.1} parent=5 // pred_check_branch
      %394 = sbr.rel (%p392) target = $region48
    $region47: #{mask_head_forward.1} parent=5 // pred_region
      %s395 = ssub.s32 %s13, 2
      // Predicated region
      $region49: #{mask_head_forward.1} parent=47 // pred_check
        %p396 = pneg %p152
      $region50: #{mask_head_forward.1} parent=47 // pred_check_branch
        %398 = sbr.rel (%p396) target = $region52
      $region51: #{mask_head_forward.1} parent=47 // pred_region
        %p399 = scmp.lt.s32.totalorder %s19, 1
        %s400 = scalar_select %p399, %s19, 1
        %s401 = scalar_lea.vmem %s5, %s400
      $region52: #{mask_head_forward.1} parent=47 // pred_fallthru
        _
    $region48: #{mask_head_forward.1} parent=5 // pred_fallthru
      _
  $region6: #{mask_head_forward.1} parent=0 // loop_footer
    %s17 = sadd.s32 1, %s13
  $region7: #{mask_head_forward.1} parent=0 // loop_footer_branch
    %12 = sbr.rel target = $region3
  $region8: #{mask_head_forward.1} parent=0 // loop_exit
    _

</llo_original>
